<compile_context>
chip_gen: v5e
topology: v5e:2x2
jax: 0.10.0
libtpu: 0.0.40
codegen_flags: <defaults>
</compile_context>

<pallas_src>
import numpy as np
import jax
import jax.numpy as jnp
from jax.experimental import pallas as pl
from jax.experimental.pallas import tpu as pltpu


# ----------------------------------------------------------------------------
# Rotary matrix: exact replica of the module-level get_rotary_matrix (including
# the overwrite of R[pos, 2i, 2i] and the theta exponent using (i - 1)).
# Used only by the pure-JAX reference.
# ----------------------------------------------------------------------------
def get_rotary_matrix(context_window, embedding_dim):
    R = np.zeros((context_window, embedding_dim, embedding_dim), dtype=np.float32)
    for position in range(context_window):
        for i in range(embedding_dim // 2):
            theta = 10000.0 ** (-2.0 * (i - 1) / embedding_dim)
            m_theta = position * theta
            R[position, 2 * i, 2 * i] = np.cos(theta)        # overwritten next line (as in reference)
            R[position, 2 * i, 2 * i] = -np.sin(m_theta)
            R[position, 2 * i + 1, 2 * i] = np.sin(m_theta)
            R[position, 2 * i + 1, 2 * i + 1] = np.cos(m_theta)
    return jnp.asarray(R)


# ----------------------------------------------------------------------------
# Elementwise decomposition of the (buggy) rotary matrix.
# x @ R[p]  ==  A[p] * x + B[p] * x_swapped      (x_swapped: even/odd pairs swapped)
#   A[p, 2i]   = -sin(p*theta_i)   A[p, 2i+1] = cos(p*theta_i)
#   B[p, 2i]   =  sin(p*theta_i)   B[p, 2i+1] = 0
# ----------------------------------------------------------------------------
def get_rotary_cos_sin(context_window, embedding_dim):
    half = embedding_dim // 2
    i = np.arange(half, dtype=np.float64)
    theta = 10000.0 ** (-2.0 * (i - 1.0) / embedding_dim)            # (half,)
    pos = np.arange(context_window, dtype=np.float64)[:, None]       # (cw, 1)
    ang = pos * theta[None, :]                                       # (cw, half)
    s = np.sin(ang)
    c = np.cos(ang)
    A = np.zeros((context_window, embedding_dim), dtype=np.float32)
    B = np.zeros((context_window, embedding_dim), dtype=np.float32)
    A[:, 0::2] = -s
    A[:, 1::2] = c
    B[:, 0::2] = s
    # B odd lanes stay 0
    return jnp.asarray(A), jnp.asarray(B)


# ----------------------------------------------------------------------------
# Fused kernel: one grid step per batch element.
#   proj = x @ W_packed      (W_packed columns: [q | q_swapped | k | k_swapped | v],
#                             each block is n_heads*d wide, heads concatenated)
#   RoPE via A*x + B*x_swapped on lane-dense (m, n_heads*d) slabs,
#   per-head causal softmax attention, head concat (free: already lane-packed),
#   output projection + bias.
# ----------------------------------------------------------------------------
def fused_mha_kernel(x_ref, wp_ref, a_ref, b_ref, wo_ref, bo_ref, o_ref):
    x = x_ref[0]                      # (m, d)
    wp = wp_ref[...]                  # (d, 5*H*d)
    A = a_ref[...]                    # (m, H*d)
    B = b_ref[...]                    # (m, H*d)
    wo = wo_ref[...]                  # (H*d, d)
    bo = bo_ref[...]                  # (1, d)

    m, d = x.shape
    Hd = A.shape[-1]
    H = Hd // d

    # One wide MXU matmul for all heads' q, q_swapped, k, k_swapped, v.
    proj = jnp.dot(x, wp, preferred_element_type=jnp.float32)        # (m, 5*H*d)
    q = proj[:, 0 * Hd:1 * Hd]
    q_sw = proj[:, 1 * Hd:2 * Hd]
    k = proj[:, 2 * Hd:3 * Hd]
    k_sw = proj[:, 3 * Hd:4 * Hd]
    v = proj[:, 4 * Hd:5 * Hd]

    # RoPE (buggy-matrix-exact) applied to all heads at once (pure VPU).
    q_rot = A * q + B * q_sw                                         # (m, H*d)
    k_rot = A * k + B * k_sw                                         # (m, H*d)

    scale = np.float32(1.0 / np.sqrt(d))

    # Causal mask: computed once, reused across heads.
    row = jax.lax.broadcasted_iota(jnp.int32, (m, m), 0)
    col = jax.lax.broadcasted_iota(jnp.int32, (m, m), 1)
    causal = col <= row

    head_outs = []
    for h in range(H):                                               # static unroll
        qh = q_rot[:, h * d:(h + 1) * d]                             # (m, d)
        kh = k_rot[:, h * d:(h + 1) * d]
        vh = v[:, h * d:(h + 1) * d]

        s = jnp.dot(qh, kh.T, preferred_element_type=jnp.float32) * scale   # (m, m)
        s = jnp.where(causal, s, -jnp.inf)
        s = s - jnp.max(s, axis=-1, keepdims=True)
        p = jnp.exp(s)
        p = p * pl.reciprocal(jnp.sum(p, axis=-1, keepdims=True), approx=True)
        head_outs.append(jnp.dot(p, vh, preferred_element_type=jnp.float32))

    heads_cat = jnp.concatenate(head_outs, axis=-1)                  # (m, H*d) lane-dense

    y = jnp.dot(heads_cat, wo, preferred_element_type=jnp.float32) + bo
    o_ref[0] = y.astype(o_ref.dtype)


# ----------------------------------------------------------------------------
# Wrapper: host-side weight packing + single pallas_call with grid=(batch,).
# ----------------------------------------------------------------------------
def rope_multihead_attention(x, wq, wk, wv, A_full, B_full, wo, bo):
    b, m, d = x.shape
    n_heads = wq.shape[0]
    Hd = n_heads * d

    # Even/odd pair-swap of output columns (folds the RoPE lane swizzle into weights).
    swap_idx = np.arange(d) ^ 1
    wq_sw = wq[..., swap_idx]
    wk_sw = wk[..., swap_idx]

    def cat_heads(w):  # (H, d, d) -> (d, H*d), head-major output columns
        return jnp.transpose(w, (1, 0, 2)).reshape(d, Hd)

    w_packed = jnp.concatenate(
        [cat_heads(wq), cat_heads(wq_sw), cat_heads(wk), cat_heads(wk_sw), cat_heads(wv)],
        axis=1)                                                      # (d, 5*H*d)

    A_tiled = jnp.tile(A_full[:m], (1, n_heads))                     # (m, H*d)
    B_tiled = jnp.tile(B_full[:m], (1, n_heads))                     # (m, H*d)

    return pl.pallas_call(
        fused_mha_kernel,
        out_shape=jax.ShapeDtypeStruct((b, m, d), x.dtype),
        grid_spec=pltpu.PrefetchScalarGridSpec(
            num_scalar_prefetch=0,
            grid=(b,),
            in_specs=[
                pl.BlockSpec((1, m, d), lambda i: (i, 0, 0)),        # x
                pl.BlockSpec((d, 5 * Hd), lambda i: (0, 0)),         # packed proj weights
                pl.BlockSpec((m, Hd), lambda i: (0, 0)),             # A (cos/sin)
                pl.BlockSpec((m, Hd), lambda i: (0, 0)),             # B (sin mask)
                pl.BlockSpec((Hd, d), lambda i: (0, 0)),             # wo
                pl.BlockSpec((1, d), lambda i: (0, 0)),              # bo
            ],
            out_specs=pl.BlockSpec((1, m, d), lambda i: (i, 0, 0)),
        ),
        compiler_params=pltpu.CompilerParams(
            dimension_semantics=("parallel",)),
    )(x, w_packed, A_tiled, B_tiled, wo, bo)


# ----------------------------------------------------------------------------
# Pure-JAX reference (eval mode, no dropout) built from the actual (buggy) R
# matrix — validates the cos/sin decomposition and the fused kernel.
# ----------------------------------------------------------------------------
def reference(x, wq, wk, wv, R_full, wo, bo):
    b, m, d = x.shape
    R = R_full[:m]
    mask = np.tril(np.ones((m, m), dtype=bool))
    outs = []
    for h in range(wq.shape[0]):
        q = x @ wq[h]
        k = x @ wk[h]
        v = x @ wv[h]
        q_rot = jnp.einsum('bpd,pde->bpe', q, R)
        k_rot = jnp.einsum('bpd,pde->bpe', k, R)
        s = jnp.einsum('bqd,bkd->bqk', q_rot, k_rot) / np.sqrt(d)
        s = jnp.where(mask, s, -jnp.inf)
        p = jax.nn.softmax(s, axis=-1)
        outs.append(jnp.einsum('bqk,bkd->bqd', p, v))
    cat = jnp.concatenate(outs, axis=-1)
    return cat @ wo + bo


if __name__ == "__main__":
    # Small config consistent with the module's forward.
    batch = 2
    seq = 8               # m (<= context_window)
    d_model = 32
    n_heads = 4
    context_window = 16

    key = jax.random.PRNGKey(0)
    kx, kq, kk, kv, kwo, kbo = jax.random.split(key, 6)

    x = jax.random.normal(kx, (batch, seq, d_model), dtype=jnp.float32)

    # nn.Linear-style uniform init (deterministic); stored pre-transposed
    # (right-multiply form: y = x @ W).
    lim = 1.0 / np.sqrt(d_model)
    wq = jax.random.uniform(kq, (n_heads, d_model, d_model), jnp.float32, -lim, lim)
    wk = jax.random.uniform(kk, (n_heads, d_model, d_model), jnp.float32, -lim, lim)
    wv = jax.random.uniform(kv, (n_heads, d_model, d_model), jnp.float32, -lim, lim)

    lim_o = 1.0 / np.sqrt(n_heads * d_model)
    wo = jax.random.uniform(kwo, (n_heads * d_model, d_model), jnp.float32, -lim_o, lim_o)
    bo = jax.random.uniform(kbo, (1, d_model), jnp.float32, -lim_o, lim_o)

    A_full, B_full = get_rotary_cos_sin(context_window, d_model)

    out = rope_multihead_attention(x, wq, wk, wv, A_full, B_full, wo, bo)
    out = jax.block_until_ready(out)

    R_full = get_rotary_matrix(context_window, d_model)
    ref = reference(x, wq, wk, wv, R_full, wo, bo)
    np.testing.assert_allclose(np.asarray(out), np.asarray(ref), rtol=2e-3, atol=2e-3)

    print("KERNEL_OK")
</pallas_src>

<mosaic_0001>
module attributes {stable_mosaic.version = 11 : i64} {
  func.func @fused_mha_kernel(%arg0: i32, %arg1: memref<1x8x32xf32, #tpu.memory_space<vmem>>, %arg2: memref<32x640xf32, #tpu.memory_space<vmem>>, %arg3: memref<8x128xf32, #tpu.memory_space<vmem>>, %arg4: memref<8x128xf32, #tpu.memory_space<vmem>>, %arg5: memref<128x32xf32, #tpu.memory_space<vmem>>, %arg6: memref<1x32xf32, #tpu.memory_space<vmem>>, %arg7: memref<1x8x32xf32, #tpu.memory_space<vmem>>) attributes {dimension_semantics = [#tpu.dimension_semantics<parallel>], iteration_bounds = array<i64: 2>, scalar_prefetch = 0 : i64, scratch_operands = 0 : i64, tpu.core_type = #tpu.core_type<tc>, window_params = [{transform_indices = @transform_0, window_bounds = array<i64: 1, 8, 32>}, {pipeline_mode = #tpu.pipeline_mode<synchronous>, transform_indices = @transform_1, window_bounds = array<i64: 32, 640>}, {pipeline_mode = #tpu.pipeline_mode<synchronous>, transform_indices = @transform_2, window_bounds = array<i64: 8, 128>}, {pipeline_mode = #tpu.pipeline_mode<synchronous>, transform_indices = @transform_3, window_bounds = array<i64: 8, 128>}, {pipeline_mode = #tpu.pipeline_mode<synchronous>, transform_indices = @transform_4, window_bounds = array<i64: 128, 32>}, {pipeline_mode = #tpu.pipeline_mode<synchronous>, transform_indices = @transform_5, window_bounds = array<i64: 1, 32>}, {transform_indices = @transform_6, window_bounds = array<i64: 1, 8, 32>}]} {
    %c0 = arith.constant 0 : index
    %c0_0 = arith.constant 0 : index
    %c0_1 = arith.constant 0 : index
    %0 = vector.load %arg1[%c0, %c0_0, %c0_1] : memref<1x8x32xf32, #tpu.memory_space<vmem>>, vector<1x8x32xf32>
    %1 = vector.shape_cast %0 : vector<1x8x32xf32> to vector<8x32xf32>
    %c0_2 = arith.constant 0 : index
    %c0_3 = arith.constant 0 : index
    %2 = vector.load %arg2[%c0_2, %c0_3] : memref<32x640xf32, #tpu.memory_space<vmem>>, vector<32x640xf32>
    %c0_4 = arith.constant 0 : index
    %c0_5 = arith.constant 0 : index
    %3 = vector.load %arg3[%c0_4, %c0_5] : memref<8x128xf32, #tpu.memory_space<vmem>>, vector<8x128xf32>
    %c0_6 = arith.constant 0 : index
    %c0_7 = arith.constant 0 : index
    %4 = vector.load %arg4[%c0_6, %c0_7] : memref<8x128xf32, #tpu.memory_space<vmem>>, vector<8x128xf32>
    %c0_8 = arith.constant 0 : index
    %c0_9 = arith.constant 0 : index
    %5 = vector.load %arg5[%c0_8, %c0_9] : memref<128x32xf32, #tpu.memory_space<vmem>>, vector<128x32xf32>
    %c0_10 = arith.constant 0 : index
    %c0_11 = arith.constant 0 : index
    %6 = vector.load %arg6[%c0_10, %c0_11] : memref<1x32xf32, #tpu.memory_space<vmem>>, vector<1x32xf32>
    %cst = arith.constant dense<0.000000e+00> : vector<8x640xf32>
    %7 = tpu.matmul %1, %2, %cst {dimension_numbers = #tpu.dot_dimension_numbers<[1], [0], [0], [1], [0, 0, 1, 1], [], []>} : vector<8x32xf32>, vector<32x640xf32>, vector<8x640xf32> -> vector<8x640xf32>
    %8 = vector.extract_strided_slice %7 {offsets = [0, 0], sizes = [8, 128], strides = [1, 1]} : vector<8x640xf32> to vector<8x128xf32>
    %9 = vector.extract_strided_slice %7 {offsets = [0, 128], sizes = [8, 128], strides = [1, 1]} : vector<8x640xf32> to vector<8x128xf32>
    %10 = vector.extract_strided_slice %7 {offsets = [0, 256], sizes = [8, 128], strides = [1, 1]} : vector<8x640xf32> to vector<8x128xf32>
    %11 = vector.extract_strided_slice %7 {offsets = [0, 384], sizes = [8, 128], strides = [1, 1]} : vector<8x640xf32> to vector<8x128xf32>
    %12 = vector.extract_strided_slice %7 {offsets = [0, 512], sizes = [8, 128], strides = [1, 1]} : vector<8x640xf32> to vector<8x128xf32>
    %13 = arith.mulf %3, %8 : vector<8x128xf32>
    %14 = arith.mulf %4, %9 : vector<8x128xf32>
    %15 = arith.addf %13, %14 : vector<8x128xf32>
    %16 = arith.mulf %3, %10 : vector<8x128xf32>
    %17 = arith.mulf %4, %11 : vector<8x128xf32>
    %18 = arith.addf %16, %17 : vector<8x128xf32>
    %19 = tpu.iota {dimensions = array<i32: 0>} : vector<8x8xi32>
    %20 = tpu.iota {dimensions = array<i32: 1>} : vector<8x8xi32>
    %21 = arith.cmpi sle, %20, %19 : vector<8x8xi32>
    %22 = vector.extract_strided_slice %15 {offsets = [0, 0], sizes = [8, 32], strides = [1, 1]} : vector<8x128xf32> to vector<8x32xf32>
    %23 = vector.extract_strided_slice %18 {offsets = [0, 0], sizes = [8, 32], strides = [1, 1]} : vector<8x128xf32> to vector<8x32xf32>
    %24 = vector.extract_strided_slice %12 {offsets = [0, 0], sizes = [8, 32], strides = [1, 1]} : vector<8x128xf32> to vector<8x32xf32>
    %25 = tpu.transpose %23, [1, 0] : vector<8x32xf32> -> vector<32x8xf32>
    %cst_12 = arith.constant dense<0.000000e+00> : vector<8x8xf32>
    %26 = tpu.matmul %22, %25, %cst_12 {dimension_numbers = #tpu.dot_dimension_numbers<[1], [0], [0], [1], [0, 0, 1, 1], [], []>} : vector<8x32xf32>, vector<32x8xf32>, vector<8x8xf32> -> vector<8x8xf32>
    %cst_13 = arith.constant 0.176776692 : f32
    %27 = vector.broadcast %cst_13 : f32 to vector<8x8xf32>
    %28 = arith.mulf %26, %27 : vector<8x8xf32>
    %cst_14 = arith.constant 0xFF800000 : f32
    %29 = vector.broadcast %cst_14 : f32 to vector<8x8xf32>
    %30 = arith.select %21, %28, %29 : vector<8x8xi1>, vector<8x8xf32>
    %cst_15 = arith.constant dense<0xFF800000> : vector<8xf32>
    %31 = vector.multi_reduction <maximumf>, %30, %cst_15 [1] : vector<8x8xf32> to vector<8xf32>
    %32 = vector.shape_cast %31 : vector<8xf32> to vector<8x1xf32>
    %33 = vector.broadcast %32 : vector<8x1xf32> to vector<8x8xf32>
    %34 = arith.subf %30, %33 : vector<8x8xf32>
    %35 = math.exp %34 : vector<8x8xf32>
    %cst_16 = arith.constant dense<0.000000e+00> : vector<8xf32>
    %36 = vector.multi_reduction <add>, %35, %cst_16 [1] : vector<8x8xf32> to vector<8xf32>
    %37 = vector.shape_cast %36 : vector<8xf32> to vector<8x1xf32>
    %38 = tpu.reciprocal %37 {approx = true} : vector<8x1xf32> -> vector<8x1xf32>
    %39 = vector.broadcast %38 : vector<8x1xf32> to vector<8x8xf32>
    %40 = arith.mulf %35, %39 : vector<8x8xf32>
    %cst_17 = arith.constant dense<0.000000e+00> : vector<8x32xf32>
    %41 = tpu.matmul %40, %24, %cst_17 {dimension_numbers = #tpu.dot_dimension_numbers<[1], [0], [0], [1], [0, 0, 1, 1], [], []>} : vector<8x8xf32>, vector<8x32xf32>, vector<8x32xf32> -> vector<8x32xf32>
    %42 = vector.extract_strided_slice %15 {offsets = [0, 32], sizes = [8, 32], strides = [1, 1]} : vector<8x128xf32> to vector<8x32xf32>
    %43 = vector.extract_strided_slice %18 {offsets = [0, 32], sizes = [8, 32], strides = [1, 1]} : vector<8x128xf32> to vector<8x32xf32>
    %44 = vector.extract_strided_slice %12 {offsets = [0, 32], sizes = [8, 32], strides = [1, 1]} : vector<8x128xf32> to vector<8x32xf32>
    %45 = tpu.transpose %43, [1, 0] : vector<8x32xf32> -> vector<32x8xf32>
    %cst_18 = arith.constant dense<0.000000e+00> : vector<8x8xf32>
    %46 = tpu.matmul %42, %45, %cst_18 {dimension_numbers = #tpu.dot_dimension_numbers<[1], [0], [0], [1], [0, 0, 1, 1], [], []>} : vector<8x32xf32>, vector<32x8xf32>, vector<8x8xf32> -> vector<8x8xf32>
    %cst_19 = arith.constant 0.176776692 : f32
    %47 = vector.broadcast %cst_19 : f32 to vector<8x8xf32>
    %48 = arith.mulf %46, %47 : vector<8x8xf32>
    %cst_20 = arith.constant 0xFF800000 : f32
    %49 = vector.broadcast %cst_20 : f32 to vector<8x8xf32>
    %50 = arith.select %21, %48, %49 : vector<8x8xi1>, vector<8x8xf32>
    %cst_21 = arith.constant dense<0xFF800000> : vector<8xf32>
    %51 = vector.multi_reduction <maximumf>, %50, %cst_21 [1] : vector<8x8xf32> to vector<8xf32>
    %52 = vector.shape_cast %51 : vector<8xf32> to vector<8x1xf32>
    %53 = vector.broadcast %52 : vector<8x1xf32> to vector<8x8xf32>
    %54 = arith.subf %50, %53 : vector<8x8xf32>
    %55 = math.exp %54 : vector<8x8xf32>
    %cst_22 = arith.constant dense<0.000000e+00> : vector<8xf32>
    %56 = vector.multi_reduction <add>, %55, %cst_22 [1] : vector<8x8xf32> to vector<8xf32>
    %57 = vector.shape_cast %56 : vector<8xf32> to vector<8x1xf32>
    %58 = tpu.reciprocal %57 {approx = true} : vector<8x1xf32> -> vector<8x1xf32>
    %59 = vector.broadcast %58 : vector<8x1xf32> to vector<8x8xf32>
    %60 = arith.mulf %55, %59 : vector<8x8xf32>
    %cst_23 = arith.constant dense<0.000000e+00> : vector<8x32xf32>
    %61 = tpu.matmul %60, %44, %cst_23 {dimension_numbers = #tpu.dot_dimension_numbers<[1], [0], [0], [1], [0, 0, 1, 1], [], []>} : vector<8x8xf32>, vector<8x32xf32>, vector<8x32xf32> -> vector<8x32xf32>
    %62 = vector.extract_strided_slice %15 {offsets = [0, 64], sizes = [8, 32], strides = [1, 1]} : vector<8x128xf32> to vector<8x32xf32>
    %63 = vector.extract_strided_slice %18 {offsets = [0, 64], sizes = [8, 32], strides = [1, 1]} : vector<8x128xf32> to vector<8x32xf32>
    %64 = vector.extract_strided_slice %12 {offsets = [0, 64], sizes = [8, 32], strides = [1, 1]} : vector<8x128xf32> to vector<8x32xf32>
    %65 = tpu.transpose %63, [1, 0] : vector<8x32xf32> -> vector<32x8xf32>
    %cst_24 = arith.constant dense<0.000000e+00> : vector<8x8xf32>
    %66 = tpu.matmul %62, %65, %cst_24 {dimension_numbers = #tpu.dot_dimension_numbers<[1], [0], [0], [1], [0, 0, 1, 1], [], []>} : vector<8x32xf32>, vector<32x8xf32>, vector<8x8xf32> -> vector<8x8xf32>
    %cst_25 = arith.constant 0.176776692 : f32
    %67 = vector.broadcast %cst_25 : f32 to vector<8x8xf32>
    %68 = arith.mulf %66, %67 : vector<8x8xf32>
    %cst_26 = arith.constant 0xFF800000 : f32
    %69 = vector.broadcast %cst_26 : f32 to vector<8x8xf32>
    %70 = arith.select %21, %68, %69 : vector<8x8xi1>, vector<8x8xf32>
    %cst_27 = arith.constant dense<0xFF800000> : vector<8xf32>
    %71 = vector.multi_reduction <maximumf>, %70, %cst_27 [1] : vector<8x8xf32> to vector<8xf32>
    %72 = vector.shape_cast %71 : vector<8xf32> to vector<8x1xf32>
    %73 = vector.broadcast %72 : vector<8x1xf32> to vector<8x8xf32>
    %74 = arith.subf %70, %73 : vector<8x8xf32>
    %75 = math.exp %74 : vector<8x8xf32>
    %cst_28 = arith.constant dense<0.000000e+00> : vector<8xf32>
    %76 = vector.multi_reduction <add>, %75, %cst_28 [1] : vector<8x8xf32> to vector<8xf32>
    %77 = vector.shape_cast %76 : vector<8xf32> to vector<8x1xf32>
    %78 = tpu.reciprocal %77 {approx = true} : vector<8x1xf32> -> vector<8x1xf32>
    %79 = vector.broadcast %78 : vector<8x1xf32> to vector<8x8xf32>
    %80 = arith.mulf %75, %79 : vector<8x8xf32>
    %cst_29 = arith.constant dense<0.000000e+00> : vector<8x32xf32>
    %81 = tpu.matmul %80, %64, %cst_29 {dimension_numbers = #tpu.dot_dimension_numbers<[1], [0], [0], [1], [0, 0, 1, 1], [], []>} : vector<8x8xf32>, vector<8x32xf32>, vector<8x32xf32> -> vector<8x32xf32>
    %82 = vector.extract_strided_slice %15 {offsets = [0, 96], sizes = [8, 32], strides = [1, 1]} : vector<8x128xf32> to vector<8x32xf32>
    %83 = vector.extract_strided_slice %18 {offsets = [0, 96], sizes = [8, 32], strides = [1, 1]} : vector<8x128xf32> to vector<8x32xf32>
    %84 = vector.extract_strided_slice %12 {offsets = [0, 96], sizes = [8, 32], strides = [1, 1]} : vector<8x128xf32> to vector<8x32xf32>
    %85 = tpu.transpose %83, [1, 0] : vector<8x32xf32> -> vector<32x8xf32>
    %cst_30 = arith.constant dense<0.000000e+00> : vector<8x8xf32>
    %86 = tpu.matmul %82, %85, %cst_30 {dimension_numbers = #tpu.dot_dimension_numbers<[1], [0], [0], [1], [0, 0, 1, 1], [], []>} : vector<8x32xf32>, vector<32x8xf32>, vector<8x8xf32> -> vector<8x8xf32>
    %cst_31 = arith.constant 0.176776692 : f32
    %87 = vector.broadcast %cst_31 : f32 to vector<8x8xf32>
    %88 = arith.mulf %86, %87 : vector<8x8xf32>
    %cst_32 = arith.constant 0xFF800000 : f32
    %89 = vector.broadcast %cst_32 : f32 to vector<8x8xf32>
    %90 = arith.select %21, %88, %89 : vector<8x8xi1>, vector<8x8xf32>
    %cst_33 = arith.constant dense<0xFF800000> : vector<8xf32>
    %91 = vector.multi_reduction <maximumf>, %90, %cst_33 [1] : vector<8x8xf32> to vector<8xf32>
    %92 = vector.shape_cast %91 : vector<8xf32> to vector<8x1xf32>
    %93 = vector.broadcast %92 : vector<8x1xf32> to vector<8x8xf32>
    %94 = arith.subf %90, %93 : vector<8x8xf32>
    %95 = math.exp %94 : vector<8x8xf32>
    %cst_34 = arith.constant dense<0.000000e+00> : vector<8xf32>
    %96 = vector.multi_reduction <add>, %95, %cst_34 [1] : vector<8x8xf32> to vector<8xf32>
    %97 = vector.shape_cast %96 : vector<8xf32> to vector<8x1xf32>
    %98 = tpu.reciprocal %97 {approx = true} : vector<8x1xf32> -> vector<8x1xf32>
    %99 = vector.broadcast %98 : vector<8x1xf32> to vector<8x8xf32>
    %100 = arith.mulf %95, %99 : vector<8x8xf32>
    %cst_35 = arith.constant dense<0.000000e+00> : vector<8x32xf32>
    %101 = tpu.matmul %100, %84, %cst_35 {dimension_numbers = #tpu.dot_dimension_numbers<[1], [0], [0], [1], [0, 0, 1, 1], [], []>} : vector<8x8xf32>, vector<8x32xf32>, vector<8x32xf32> -> vector<8x32xf32>
    %102 = tpu.concatenate %41, %61, %81, %101 in 1 : vector<8x32xf32>, vector<8x32xf32>, vector<8x32xf32>, vector<8x32xf32> -> vector<8x128xf32>
    %cst_36 = arith.constant dense<0.000000e+00> : vector<8x32xf32>
    %103 = tpu.matmul %102, %5, %cst_36 {dimension_numbers = #tpu.dot_dimension_numbers<[1], [0], [0], [1], [0, 0, 1, 1], [], []>} : vector<8x128xf32>, vector<128x32xf32>, vector<8x32xf32> -> vector<8x32xf32>
    %104 = vector.broadcast %6 : vector<1x32xf32> to vector<8x32xf32>
    %105 = arith.addf %103, %104 : vector<8x32xf32>
    %c0_37 = arith.constant 0 : index
    %c0_38 = arith.constant 0 : index
    %c0_39 = arith.constant 0 : index
    %106 = vector.load %arg7[%c0_37, %c0_38, %c0_39] : memref<1x8x32xf32, #tpu.memory_space<vmem>>, vector<1x8x32xf32>
    %107 = vector.shape_cast %106 : vector<1x8x32xf32> to vector<8x32xf32>
    %108 = vector.shape_cast %105 : vector<8x32xf32> to vector<1x8x32xf32>
    tpu.vector_store %arg7[%c0_37, %c0_38, %c0_39], %108 {strides = array<i32>} : memref<1x8x32xf32, #tpu.memory_space<vmem>>, vector<1x8x32xf32>,
    return
  }
  func.func @transform_0(%arg0: i32) -> (i32, i32, i32) {
    %c0_i32 = arith.constant 0 : i32
    %c0_i32_0 = arith.constant 0 : i32
    %c0_i32_1 = arith.constant 0 : i32
    return %arg0, %c0_i32, %c0_i32_0 : i32, i32, i32
  }
  func.func @transform_1(%arg0: i32) -> (i32, i32) {
    %c0_i32 = arith.constant 0 : i32
    %c0_i32_0 = arith.constant 0 : i32
    %c0_i32_1 = arith.constant 0 : i32
    return %c0_i32, %c0_i32_0 : i32, i32
  }
  func.func @transform_2(%arg0: i32) -> (i32, i32) {
    %c0_i32 = arith.constant 0 : i32
    %c0_i32_0 = arith.constant 0 : i32
    %c0_i32_1 = arith.constant 0 : i32
    return %c0_i32, %c0_i32_0 : i32, i32
  }
  func.func @transform_3(%arg0: i32) -> (i32, i32) {
    %c0_i32 = arith.constant 0 : i32
    %c0_i32_0 = arith.constant 0 : i32
    %c0_i32_1 = arith.constant 0 : i32
    return %c0_i32, %c0_i32_0 : i32, i32
  }
  func.func @transform_4(%arg0: i32) -> (i32, i32) {
    %c0_i32 = arith.constant 0 : i32
    %c0_i32_0 = arith.constant 0 : i32
    %c0_i32_1 = arith.constant 0 : i32
    return %c0_i32, %c0_i32_0 : i32, i32
  }
  func.func @transform_5(%arg0: i32) -> (i32, i32) {
    %c0_i32 = arith.constant 0 : i32
    %c0_i32_0 = arith.constant 0 : i32
    %c0_i32_1 = arith.constant 0 : i32
    return %c0_i32, %c0_i32_0 : i32, i32
  }
  func.func @transform_6(%arg0: i32) -> (i32, i32, i32) {
    %c0_i32 = arith.constant 0 : i32
    %c0_i32_0 = arith.constant 0 : i32
    %c0_i32_1 = arith.constant 0 : i32
    return %arg0, %c0_i32, %c0_i32_0 : i32, i32, i32
  }
}

</mosaic_0001>

<llo_original>
// kernel: tpu_custom_call.1
$region0: #{tpu_custom_call.1}
  #allocation0 [shape = 'u32[]', space=smem, size = 0x4, offset = 0x4, fixed_abs, tag = 'smem constant byte address 0x4 - core index']
  #allocation1 [shape = 'u32[72,128]{1,0:T(1,128)}', space=vmem, size = 0x9000, scoped, tag = 'internal scratch']
  %s0 = inlined_call_operand.hbm [shape: f32[2,8,32], index: 0, kind: input, shape index: {}]
  %s1 = inlined_call_operand.vmem [shape: f32[32,640], index: 1, kind: input, shape index: {}]
  %s2 = inlined_call_operand.hbm [shape: f32[8,128], index: 2, kind: input, shape index: {}]
  %s3 = inlined_call_operand.hbm [shape: f32[8,128], index: 3, kind: input, shape index: {}]
  %s4 = inlined_call_operand.vmem [shape: f32[128,32], index: 4, kind: input, shape index: {}]
  %s5 = inlined_call_operand.vmem [shape: f32[1,32], index: 5, kind: input, shape index: {}]
  %s6 = inlined_call_operand.hbm [shape: f32[2,8,32], index: 6, kind: output, shape index: {}]
  %s7 = sld [smem:[#allocation0]]
  $region69: #{tpu_custom_call.1} parent=0
    _
  %s9 = ssub.s32 1, %s7
  %s10 = scalar_select 0, %s9, %s7
  $region1: #{tpu_custom_call.1} parent=0
    #allocation2 [shape = 'u8[8192]{0}', space=vmem, size = 0x2000, scoped, tag = 'input window, operand 0']
    #allocation3 [shape = 's32[2]{0}', space=sflag, size = 0x8, scoped, tag = 'scoped memory for tpu_custom_call.1']
    #allocation4 [shape = 's32[2]{0}', space=sflag, size = 0x8, scoped, tag = 'scoped memory for tpu_custom_call.1']
    #allocation5 [shape = 'u8[4096]{0}', space=vmem, size = 0x1000, scoped, tag = 'input window, operand 2, single buffered']
    #allocation6 [shape = 's32[1]{0}', space=sflag, size = 0x4, scoped, tag = 'scoped memory for tpu_custom_call.1']
    #allocation7 [shape = 'u8[4096]{0}', space=vmem, size = 0x1000, scoped, tag = 'input window, operand 3, single buffered']
    #allocation8 [shape = 'u8[8192]{0}', space=vmem, size = 0x2000, scoped, tag = 'output window, operand 0']
    %11 = vsyncpa [#allocation3], 0
    %s12 = scalar_lea.sflag [#allocation3], 1
    %13 = vsyncpa %s12, 0
    %14 = vsyncpa [#allocation6], 0
    %15 = vsyncpa [#allocation4], 0
    %s16 = scalar_lea.sflag [#allocation4], 1
    %17 = vsyncpa %s16, 0
    loop: start=0, step=1, limit=4
    $region2: #{tpu_custom_call.1} parent=1 // loop_pre_header
      _
    $region3: #{tpu_custom_call.1} parent=1 // loop_header
      %s19 = sphi 0, %s23
      %p20 = scmp.ge.s32.totalorder %s19, 4
      %s29 = sphi 0, %s31
      %s32 = sphi 0, %s29
      %s33 = sphi 0, %s32
      %s49 = sphi 0, %s33
      %s53 = sphi 0, %s53
      %s55 = sphi 0, %s53
      %s56 = sphi 0, %s55
      %s70 = sphi 0, %s56
      %s74 = sphi 0, %s74
      %s76 = sphi 0, %s74
      %s77 = sphi 0, %s76
      %s91 = sphi 0, %s77
      %s95 = sphi 0, %s95
      %s97 = sphi 0, %s95
      %s98 = sphi 0, %s97
      %s112 = sphi 0, %s98
      %s116 = sphi 0, %s116
      %s118 = sphi 0, %s116
      %s119 = sphi 0, %s118
      %s133 = sphi 0, %s119
      %s137 = sphi 0, %s137
      %s139 = sphi 0, %s137
      %s140 = sphi 0, %s139
      %s154 = sphi 0, %s140
      %s160 = sphi 0, %s162
      %s163 = sphi 0, %s160
      %s164 = sphi 0, %s163
      %s180 = sphi 0, %s164
    $region4: #{tpu_custom_call.1} parent=1 // loop_header_branch
      %22 = sbr.rel (%p20) target = $region8
    $region5: #{tpu_custom_call.1} parent=1 // loop_body
      %s24 = ssub.s32 %s19, 1
      %s25 = ssub.s32 %s19, 2
      %s26 = sadd.s32 %s19, 1
      %s27 = ssub.s32 %s19, %s26
      %p28 = scmp.eq.s32.totalorder %s27, 0
      %s30 = sadd.s32 %s29, 1
      %s31 = scalar_select %p28, %s29, %s30
      %p34 = pneg %p28
      %p35 = scmp.eq.s32.totalorder %s19, 1
      %p36 = por %p34, %p35
      %p37 = scmp.ne.s32.totalorder %s29, %s32
      %p38 = scmp.eq.s32.totalorder %s19, 0
      %p39 = por %p37, %p38
      %p40 = scmp.ne.s32.totalorder %s29, %s32
      %p41 = scmp.eq.s32.totalorder %s24, 1
      %p42 = por %p40, %p41
      %p43 = scmp.ne.s32.totalorder %s32, %s33
      %p44 = scmp.eq.s32.totalorder %s24, 0
      %p45 = por %p43, %p44
      %p46 = scmp.ne.s32.totalorder %s32, %s33
      %p47 = scmp.eq.s32.totalorder %s25, 1
      %p48 = por %p46, %p47
      %p50 = scmp.ne.s32.totalorder %s33, %s49
      %p51 = scmp.eq.s32.totalorder %s25, 0
      %p52 = por %p50, %p51
      %s54 = sadd.s32 %s53, 1
      %p57 = scmp.eq.s32.totalorder %s19, 1
      %p58 = scmp.ne.s32.totalorder %s53, %s55
      %p59 = scmp.eq.s32.totalorder %s19, 0
      %p60 = por %p58, %p59
      %p61 = scmp.ne.s32.totalorder %s53, %s55
      %p62 = scmp.eq.s32.totalorder %s24, 1
      %p63 = por %p61, %p62
      %p64 = scmp.ne.s32.totalorder %s55, %s56
      %p65 = scmp.eq.s32.totalorder %s24, 0
      %p66 = por %p64, %p65
      %p67 = scmp.ne.s32.totalorder %s55, %s56
      %p68 = scmp.eq.s32.totalorder %s25, 1
      %p69 = por %p67, %p68
      %p71 = scmp.ne.s32.totalorder %s56, %s70
      %p72 = scmp.eq.s32.totalorder %s25, 0
      %p73 = por %p71, %p72
      %s75 = sadd.s32 %s74, 1
      %p78 = scmp.eq.s32.totalorder %s19, 1
      %p79 = scmp.ne.s32.totalorder %s74, %s76
      %p80 = scmp.eq.s32.totalorder %s19, 0
      %p81 = por %p79, %p80
      %p82 = scmp.ne.s32.totalorder %s74, %s76
      %p83 = scmp.eq.s32.totalorder %s24, 1
      %p84 = por %p82, %p83
      %p85 = scmp.ne.s32.totalorder %s76, %s77
      %p86 = scmp.eq.s32.totalorder %s24, 0
      %p87 = por %p85, %p86
      %p88 = scmp.ne.s32.totalorder %s76, %s77
      %p89 = scmp.eq.s32.totalorder %s25, 1
      %p90 = por %p88, %p89
      %p92 = scmp.ne.s32.totalorder %s77, %s91
      %p93 = scmp.eq.s32.totalorder %s25, 0
      %p94 = por %p92, %p93
      %s96 = sadd.s32 %s95, 1
      %p99 = scmp.eq.s32.totalorder %s19, 1
      %p100 = scmp.ne.s32.totalorder %s95, %s97
      %p101 = scmp.eq.s32.totalorder %s19, 0
      %p102 = por %p100, %p101
      %p103 = scmp.ne.s32.totalorder %s95, %s97
      %p104 = scmp.eq.s32.totalorder %s24, 1
      %p105 = por %p103, %p104
      %p106 = scmp.ne.s32.totalorder %s97, %s98
      %p107 = scmp.eq.s32.totalorder %s24, 0
      %p108 = por %p106, %p107
      %p109 = scmp.ne.s32.totalorder %s97, %s98
      %p110 = scmp.eq.s32.totalorder %s25, 1
      %p111 = por %p109, %p110
      %p113 = scmp.ne.s32.totalorder %s98, %s112
      %p114 = scmp.eq.s32.totalorder %s25, 0
      %p115 = por %p113, %p114
      %s117 = sadd.s32 %s116, 1
      %p120 = scmp.eq.s32.totalorder %s19, 1
      %p121 = scmp.ne.s32.totalorder %s116, %s118
      %p122 = scmp.eq.s32.totalorder %s19, 0
      %p123 = por %p121, %p122
      %p124 = scmp.ne.s32.totalorder %s116, %s118
      %p125 = scmp.eq.s32.totalorder %s24, 1
      %p126 = por %p124, %p125
      %p127 = scmp.ne.s32.totalorder %s118, %s119
      %p128 = scmp.eq.s32.totalorder %s24, 0
      %p129 = por %p127, %p128
      %p130 = scmp.ne.s32.totalorder %s118, %s119
      %p131 = scmp.eq.s32.totalorder %s25, 1
      %p132 = por %p130, %p131
      %p134 = scmp.ne.s32.totalorder %s119, %s133
      %p135 = scmp.eq.s32.totalorder %s25, 0
      %p136 = por %p134, %p135
      %s138 = sadd.s32 %s137, 1
      %p141 = scmp.eq.s32.totalorder %s19, 1
      %p142 = scmp.ne.s32.totalorder %s137, %s139
      %p143 = scmp.eq.s32.totalorder %s19, 0
      %p144 = por %p142, %p143
      %p145 = scmp.ne.s32.totalorder %s137, %s139
      %p146 = scmp.eq.s32.totalorder %s24, 1
      %p147 = por %p145, %p146
      %p148 = scmp.ne.s32.totalorder %s139, %s140
      %p149 = scmp.eq.s32.totalorder %s24, 0
      %p150 = por %p148, %p149
      %p151 = scmp.ne.s32.totalorder %s139, %s140
      %p152 = scmp.eq.s32.totalorder %s25, 1
      %p153 = por %p151, %p152
      %p155 = scmp.ne.s32.totalorder %s140, %s154
      %p156 = scmp.eq.s32.totalorder %s25, 0
      %p157 = por %p155, %p156
      %s158 = ssub.s32 %s19, %s26
      %p159 = scmp.eq.s32.totalorder %s158, 0
      %s161 = sadd.s32 %s160, 1
      %s162 = scalar_select %p159, %s160, %s161
      %p165 = pneg %p159
      %p166 = scmp.eq.s32.totalorder %s19, 1
      %p167 = por %p165, %p166
      %p168 = scmp.ne.s32.totalorder %s160, %s163
      %p169 = scmp.eq.s32.totalorder %s19, 0
      %p170 = por %p168, %p169
      %p171 = scmp.ne.s32.totalorder %s160, %s163
      %p172 = scmp.eq.s32.totalorder %s24, 1
      %p173 = por %p171, %p172
      %p174 = scmp.ne.s32.totalorder %s163, %s164
      %p175 = scmp.eq.s32.totalorder %s24, 0
      %p176 = por %p174, %p175
      %p177 = scmp.ne.s32.totalorder %s163, %s164
      %p178 = scmp.eq.s32.totalorder %s25, 1
      %p179 = por %p177, %p178
      %p181 = scmp.ne.s32.totalorder %s164, %s180
      %p182 = scmp.eq.s32.totalorder %s25, 0
      %p183 = por %p181, %p182
      %p184 = scmp.le.s32.totalorder 1, %s19
      %p185 = scmp.lt.s32.totalorder %s19, 3
      %p186 = pnand %p184, %p185
      %p187 = pneg %p186
      // Predicated region
      $region9: #{tpu_custom_call.1} parent=5 // pred_check
        _
      $region10: #{tpu_custom_call.1} parent=5 // pred_check_branch
        %189 = sbr.rel (%p186) target = $region12
      $region11: #{tpu_custom_call.1} parent=5 // pred_region
        %s190 = ssub.s32 %s19, 1
        // Predicated region
        $region13: #{tpu_custom_call.1} parent=11 // pred_check
          %p191 = pneg %p66
        $region14: #{tpu_custom_call.1} parent=11 // pred_check_branch
          %193 = sbr.rel (%p191) target = $region16
        $region15: #{tpu_custom_call.1} parent=11 // pred_region
          _
        $region16: #{tpu_custom_call.1} parent=11 // pred_fallthru
          _
        // Predicated region
        $region17: #{tpu_custom_call.1} parent=11 // pred_check
          %p194 = pneg %p87
        $region18: #{tpu_custom_call.1} parent=11 // pred_check_branch
          %196 = sbr.rel (%p194) target = $region20
        $region19: #{tpu_custom_call.1} parent=11 // pred_region
          %198 = vsyncadd [#allocation6], 0
          %s200 = sshll.u32 %s2, 4
          %s201 = int_to_ptr.hbm [resolvable:$true] %s200
          %s202 = sshll.u32 [#allocation5], 4
          %s203 = int_to_ptr.vmem [resolvable:$true] %s202
          %205 = dma.hbm_to_vmem [thread:$0]  %s201, 128, %s203, [#allocation6]
        $region20: #{tpu_custom_call.1} parent=11 // pred_fallthru
          _
        // Predicated region
        $region21: #{tpu_custom_call.1} parent=11 // pred_check
          %p206 = pneg %p108
        $region22: #{tpu_custom_call.1} parent=11 // pred_check_branch
          %208 = sbr.rel (%p206) target = $region24
        $region23: #{tpu_custom_call.1} parent=11 // pred_region
          %210 = vsyncadd [#allocation6], 0
          %s212 = sshll.u32 %s3, 4
          %s213 = int_to_ptr.hbm [resolvable:$true] %s212
          %s214 = sshll.u32 [#allocation7], 4
          %s215 = int_to_ptr.vmem [resolvable:$true] %s214
          %217 = dma.hbm_to_vmem [thread:$0]  %s213, 128, %s215, [#allocation6]
        $region24: #{tpu_custom_call.1} parent=11 // pred_fallthru
          _
        // Predicated region
        $region25: #{tpu_custom_call.1} parent=11 // pred_check
          %p218 = pneg %p129
        $region26: #{tpu_custom_call.1} parent=11 // pred_check_branch
          %220 = sbr.rel (%p218) target = $region28
        $region27: #{tpu_custom_call.1} parent=11 // pred_region
          _
        $region28: #{tpu_custom_call.1} parent=11 // pred_fallthru
          _
        // Predicated region
        $region29: #{tpu_custom_call.1} parent=11 // pred_check
          %p221 = pneg %p150
        $region30: #{tpu_custom_call.1} parent=11 // pred_check_branch
          %223 = sbr.rel (%p221) target = $region32
        $region31: #{tpu_custom_call.1} parent=11 // pred_region
          _
        $region32: #{tpu_custom_call.1} parent=11 // pred_fallthru
          _
      $region12: #{tpu_custom_call.1} parent=5 // pred_fallthru
        _
      %p224 = scmp.lt.s32.totalorder %s19, 2
      // Predicated region
      $region33: #{tpu_custom_call.1} parent=5 // pred_check
        %p225 = pneg %p224
      $region34: #{tpu_custom_call.1} parent=5 // pred_check_branch
        %227 = sbr.rel (%p225) target = $region36
      $region35: #{tpu_custom_call.1} parent=5 // pred_region
        // Predicated region
        $region37: #{tpu_custom_call.1} parent=35 // pred_check
          %p228 = pneg %p39
        $region38: #{tpu_custom_call.1} parent=35 // pred_check_branch
          %230 = sbr.rel (%p228) target = $region40
        $region39: #{tpu_custom_call.1} parent=35 // pred_region
          %s231 = sand.u32 %s29, 1
          %s232 = scalar_lea.sflag [#allocation3], %s231
          %s233 = sand.u32 %s29, 1
          %s234 = smul.addr %s233, 8
          %s235 = scalar_lea.vmem [#allocation2], %s234
          %237 = vsyncadd %s232, 0
          %s238 = smul.addr %s19, 8
          %s239 = scalar_lea.hbm %s0, %s238
          %s241 = sshll.u32 %s239, 4
          %s242 = int_to_ptr.hbm [resolvable:$true] %s241
          %s243 = sshll.u32 %s235, 4
          %s244 = int_to_ptr.vmem [resolvable:$true] %s243
          %246 = dma.hbm_to_vmem [thread:$0]  %s242, 128, %s244, %s232
        $region40: #{tpu_custom_call.1} parent=35 // pred_fallthru
          _
      $region36: #{tpu_custom_call.1} parent=5 // pred_fallthru
        _
      %p247 = scmp.le.s32.totalorder 1, %s19
      %p248 = scmp.lt.s32.totalorder %s19, 3
      %p249 = pnand %p247, %p248
      %p250 = pneg %p249
      // Predicated region
      $region41: #{tpu_custom_call.1} parent=5 // pred_check
        _
      $region42: #{tpu_custom_call.1} parent=5 // pred_check_branch
        %252 = sbr.rel (%p249) target = $region44
      $region43: #{tpu_custom_call.1} parent=5 // pred_region
        %s253 = ssub.s32 %s19, 1
        %s254 = sand.u32 %s32, 1
        %s255 = scalar_lea.sflag [#allocation3], %s254
        %s256 = sand.u32 %s32, 1
        %s257 = smul.addr %s256, 8
        %s258 = scalar_lea.vmem [#allocation2], %s257
        // Predicated region
        $region45: #{tpu_custom_call.1} parent=43 // pred_check
          %p259 = pneg %p45
        $region46: #{tpu_custom_call.1} parent=43 // pred_check_branch
          %261 = sbr.rel (%p259) target = $region48
        $region47: #{tpu_custom_call.1} parent=43 // pred_region
          %263 = dma.done %s255, 128
        $region48: #{tpu_custom_call.1} parent=43 // pred_fallthru
          _
        // Predicated region
        $region49: #{tpu_custom_call.1} parent=43 // pred_check
          %p264 = pneg %p87
        $region50: #{tpu_custom_call.1} parent=43 // pred_check_branch
          %266 = sbr.rel (%p264) target = $region52
        $region51: #{tpu_custom_call.1} parent=43 // pred_region
          %268 = dma.done [#allocation6], 128
        $region52: #{tpu_custom_call.1} parent=43 // pred_fallthru
          _
        // Predicated region
        $region53: #{tpu_custom_call.1} parent=43 // pred_check
          %p269 = pneg %p108
        $region54: #{tpu_custom_call.1} parent=43 // pred_check_branch
          %271 = sbr.rel (%p269) target = $region56
        $region55: #{tpu_custom_call.1} parent=43 // pred_region
          %273 = dma.done [#allocation6], 128
        $region56: #{tpu_custom_call.1} parent=43 // pred_fallthru
          _
        %s274 = sand.u32 %s32, 1
        %s275 = scalar_lea.sflag [#allocation3], %s274
        %s276 = sand.u32 %s32, 1
        %s277 = smul.addr %s276, 8
        %s278 = scalar_lea.vmem [#allocation2], %s277
        %p279 = pneg %p45
        %p280 = pneg %p42
        %p281 = pneg %p66
        %p282 = pneg %p63
        %p283 = pneg %p87
        %p284 = pneg %p84
        %p285 = pneg %p108
        %p286 = pneg %p105
        %p287 = pneg %p129
        %p288 = pneg %p126
        %p289 = pneg %p150
        %p290 = pneg %p147
        %p291 = pneg %p176
        %p292 = pneg %p173
        %s293 = sand.u32 %s163, 1
        %s294 = scalar_lea.sflag [#allocation4], %s293
        %s295 = sand.u32 %s163, 1
        %s296 = smul.addr %s295, 8
        %s297 = scalar_lea.vmem [#allocation8], %s296
        %v298 = vld [vmem:[%s258] sm:$0xff]
        %v299 = vld [vmem:[%s1] sm:$0xff]
        %v300 = vld [vmem:[%s1 + $0x8] sm:$0xff]
        %v301 = vld [vmem:[%s1 + $0x10] sm:$0xff]
        %v302 = vld [vmem:[%s1 + $0x18] sm:$0xff]
        %v303 = vld [vmem:[%s1 + $0x20] sm:$0xff]
        %v304 = vld [vmem:[%s1 + $0x28] sm:$0xff]
        %v305 = vld [vmem:[%s1 + $0x30] sm:$0xff]
        %v306 = vld [vmem:[%s1 + $0x38] sm:$0xff]
        %v307 = vld [vmem:[%s1 + $0x40] sm:$0xff]
        %v308 = vld [vmem:[%s1 + $0x48] sm:$0xff]
        %v309 = vld [vmem:[%s1 + $0x50] sm:$0xff]
        %v310 = vld [vmem:[%s1 + $0x58] sm:$0xff]
        %v311 = vld [vmem:[%s1 + $0x60] sm:$0xff]
        %v312 = vld [vmem:[%s1 + $0x68] sm:$0xff]
        %v313 = vld [vmem:[%s1 + $0x70] sm:$0xff]
        %v314 = vld [vmem:[%s1 + $0x78] sm:$0xff]
        %v315 = vld [vmem:[%s1 + $0x80] sm:$0xff]
        %v316 = vld [vmem:[%s1 + $0x88] sm:$0xff]
        %v317 = vld [vmem:[%s1 + $0x90] sm:$0xff]
        %v318 = vld [vmem:[%s1 + $0x98] sm:$0xff]
        %v319 = vld [vmem:[#allocation5] sm:$0xff]
        %v320 = vld [vmem:[#allocation7] sm:$0xff]
        %v321 = vld [vmem:[%s4] sm:$0xff]
        %v322 = vld [vmem:[%s4 + $0x8] sm:$0xff]
        %v323 = vld [vmem:[%s4 + $0x10] sm:$0xff]
        %v324 = vld [vmem:[%s4 + $0x18] sm:$0xff]
        %v325 = vld [vmem:[%s4 + $0x20] sm:$0xff]
        %v326 = vld [vmem:[%s4 + $0x28] sm:$0xff]
        %v327 = vld [vmem:[%s4 + $0x30] sm:$0xff]
        %v328 = vld [vmem:[%s4 + $0x38] sm:$0xff]
        %v329 = vld [vmem:[%s4 + $0x40] sm:$0xff]
        %v330 = vld [vmem:[%s4 + $0x48] sm:$0xff]
        %v331 = vld [vmem:[%s4 + $0x50] sm:$0xff]
        %v332 = vld [vmem:[%s4 + $0x58] sm:$0xff]
        %v333 = vld [vmem:[%s4 + $0x60] sm:$0xff]
        %v334 = vld [vmem:[%s4 + $0x68] sm:$0xff]
        %v335 = vld [vmem:[%s4 + $0x70] sm:$0xff]
        %v336 = vld [vmem:[%s4 + $0x78] sm:$0xff]
        %v337 = vld [vmem:[%s5] sm:$0x1]
        %vm338 = vcmask 261120
        %v340 = vsel %vm338, %v298, 0
        %342 = vmatpush.msra.mxu0 0.0
        %343 = vmatpush.msra.mxu0 0.0
        %344 = vmatpush.msra.mxu0 0.0
        %345 = vmatpush.msra.mxu0 0.0
        %346 = vmatpush.msra.mxu0 0.0
        %347 = vmatpush.msra.mxu0 0.0
        %348 = vmatpush.msra.mxu0 0.0
        %349 = vmatpush.msra.mxu0 0.0
        %350 = vmatpush.msra.mxu0 0.0
        %351 = vmatpush.msra.mxu0 0.0
        %352 = vmatpush.msra.mxu0 0.0
        %353 = vmatpush.msra.mxu0 0.0
        %354 = vmatpush.msra.mxu0 %v314
        %355 = vmatpush.msra.mxu0 %v309
        %356 = vmatpush.msra.mxu0 %v304
        %357 = vmatpush.msra.mxu0 %v299
        %358 = vmatmul.f32.gmra.mxu0 %v340
        %v359 = vpop.f32.mrf.mxu0
        %v360 = vadd.f32 0.0, %v359
        %361 = vdwg.mxu0
        %362 = vmatpush.msra.mxu0 0.0
        %363 = vmatpush.msra.mxu0 0.0
        %364 = vmatpush.msra.mxu0 0.0
        %365 = vmatpush.msra.mxu0 0.0
        %366 = vmatpush.msra.mxu0 0.0
        %367 = vmatpush.msra.mxu0 0.0
        %368 = vmatpush.msra.mxu0 0.0
        %369 = vmatpush.msra.mxu0 0.0
        %370 = vmatpush.msra.mxu0 0.0
        %371 = vmatpush.msra.mxu0 0.0
        %372 = vmatpush.msra.mxu0 0.0
        %373 = vmatpush.msra.mxu0 0.0
        %374 = vmatpush.msra.mxu0 %v315
        %375 = vmatpush.msra.mxu0 %v310
        %376 = vmatpush.msra.mxu0 %v305
        %377 = vmatpush.msra.mxu0 %v300
        %378 = vmatmul.f32.gmra.mxu0 %v340
        %v379 = vpop.f32.mrf.mxu0
        %v380 = vadd.f32 0.0, %v379
        %381 = vdwg.mxu0
        %382 = vmatpush.msra.mxu0 0.0
        %383 = vmatpush.msra.mxu0 0.0
        %384 = vmatpush.msra.mxu0 0.0
        %385 = vmatpush.msra.mxu0 0.0
        %386 = vmatpush.msra.mxu0 0.0
        %387 = vmatpush.msra.mxu0 0.0
        %388 = vmatpush.msra.mxu0 0.0
        %389 = vmatpush.msra.mxu0 0.0
        %390 = vmatpush.msra.mxu0 0.0
        %391 = vmatpush.msra.mxu0 0.0
        %392 = vmatpush.msra.mxu0 0.0
        %393 = vmatpush.msra.mxu0 0.0
        %394 = vmatpush.msra.mxu0 %v316
        %395 = vmatpush.msra.mxu0 %v311
        %396 = vmatpush.msra.mxu0 %v306
        %397 = vmatpush.msra.mxu0 %v301
        %398 = vmatmul.f32.gmra.mxu0 %v340
        %v399 = vpop.f32.mrf.mxu0
        %v400 = vadd.f32 0.0, %v399
        %401 = vdwg.mxu0
        %402 = vmatpush.msra.mxu0 0.0
        %403 = vmatpush.msra.mxu0 0.0
        %404 = vmatpush.msra.mxu0 0.0
        %405 = vmatpush.msra.mxu0 0.0
        %406 = vmatpush.msra.mxu0 0.0
        %407 = vmatpush.msra.mxu0 0.0
        %408 = vmatpush.msra.mxu0 0.0
        %409 = vmatpush.msra.mxu0 0.0
        %410 = vmatpush.msra.mxu0 0.0
        %411 = vmatpush.msra.mxu0 0.0
        %412 = vmatpush.msra.mxu0 0.0
        %413 = vmatpush.msra.mxu0 0.0
        %414 = vmatpush.msra.mxu0 %v317
        %415 = vmatpush.msra.mxu0 %v312
        %416 = vmatpush.msra.mxu0 %v307
        %417 = vmatpush.msra.mxu0 %v302
        %418 = vmatmul.f32.gmra.mxu0 %v340
        %v419 = vpop.f32.mrf.mxu0
        %v420 = vadd.f32 0.0, %v419
        %421 = vdwg.mxu0
        %422 = vmatpush.msra.mxu0 0.0
        %423 = vmatpush.msra.mxu0 0.0
        %424 = vmatpush.msra.mxu0 0.0
        %425 = vmatpush.msra.mxu0 0.0
        %426 = vmatpush.msra.mxu0 0.0
        %427 = vmatpush.msra.mxu0 0.0
        %428 = vmatpush.msra.mxu0 0.0
        %429 = vmatpush.msra.mxu0 0.0
        %430 = vmatpush.msra.mxu0 0.0
        %431 = vmatpush.msra.mxu0 0.0
        %432 = vmatpush.msra.mxu0 0.0
        %433 = vmatpush.msra.mxu0 0.0
        %434 = vmatpush.msra.mxu0 %v318
        %435 = vmatpush.msra.mxu0 %v313
        %436 = vmatpush.msra.mxu0 %v308
        %437 = vmatpush.msra.mxu0 %v303
        %438 = vmatmul.f32.gmra.mxu0 %v340
        %v439 = vpop.f32.mrf.mxu0
        %v440 = vadd.f32 0.0, %v439
        %441 = vdwg.mxu0
        %v442 = vmul.f32 %v319, %v360
        %v443 = vmul.f32 %v320, %v380
        %v444 = vadd.f32 %v442, %v443
        %v445 = vmul.f32 %v319, %v400
        %v446 = vmul.f32 %v320, %v420
        %v447 = vadd.f32 %v445, %v446
        %v448 = vlaneseq
        %v449 = vshrl.u32 %v448, 7
        %v450 = vlaneseq
        %v451 = vand.u32 %v450, 127
        %vm452 = vcmp.le.s32.totalorder %v451, %v449
        %v454 = vsel %vm338, %v444, 0
        %v457 = vsel %vm338, %v447, 0
        %459 = vmatpush.xpose.msra.mxu0 0.0
        %460 = vmatpush.xpose.msra.mxu0 0.0
        %461 = vmatpush.xpose.msra.mxu0 0.0
        %462 = vmatpush.xpose.msra.mxu0 0.0
        %463 = vmatpush.xpose.msra.mxu0 0.0
        %464 = vmatpush.xpose.msra.mxu0 0.0
        %465 = vmatpush.xpose.msra.mxu0 0.0
        %466 = vmatpush.xpose.msra.mxu0 0.0
        %467 = vmatpush.xpose.msra.mxu0 0.0
        %468 = vmatpush.xpose.msra.mxu0 0.0
        %469 = vmatpush.xpose.msra.mxu0 0.0
        %470 = vmatpush.xpose.msra.mxu0 0.0
        %471 = vmatpush.xpose.msra.mxu0 0.0
        %472 = vmatpush.xpose.msra.mxu0 0.0
        %473 = vmatpush.xpose.msra.mxu0 0.0
        %474 = vmatpush.xpose.msra.mxu0 %v457
        %475 = vmatmul.f32.gmra.mxu0 %v454
        %v476 = vpop.f32.mrf.mxu0
        %v477 = vadd.f32 0.0, %v476
        %478 = vdwg.mxu0
        %v479 = vmul.f32 %v477, 0.17677669
        %v480 = vsel %vm452, %v479, -inf
        %vm481 = vcmask 64512
        %v482 = vsel %vm481, %v480, -inf
        %483 = vmax.xlane.f32.xlu0 %v482
        %v484 = vpop.xlane.xlu0 %483
        %v485 = vsub.f32 %v480, %v484
        %v486 = vmul.f32 %v485, 1.442695
        %v487 = vpow.pop %v486
        %v488 = vsel %vm481, %v487, 0.0
        %489 = vadd.xlane.f32.xlu0 %v488
        %v490 = vpop.xlane.xlu0 %489
        %v491 = vrcp.pop %v490
        %v492 = vmul.f32 %v487, %v491
        %v494 = vsel %vm481, %v492, 0
        %496 = vmatpush.msra.mxu0 0.0
        %497 = vmatpush.msra.mxu0 0.0
        %498 = vmatpush.msra.mxu0 0.0
        %499 = vmatpush.msra.mxu0 0.0
        %500 = vmatpush.msra.mxu0 0.0
        %501 = vmatpush.msra.mxu0 0.0
        %502 = vmatpush.msra.mxu0 0.0
        %503 = vmatpush.msra.mxu0 0.0
        %504 = vmatpush.msra.mxu0 0.0
        %505 = vmatpush.msra.mxu0 0.0
        %506 = vmatpush.msra.mxu0 0.0
        %507 = vmatpush.msra.mxu0 0.0
        %508 = vmatpush.msra.mxu0 0.0
        %509 = vmatpush.msra.mxu0 0.0
        %510 = vmatpush.msra.mxu0 0.0
        %511 = vmatpush.msra.mxu0 %v440
        %512 = vmatmul.f32.gmra.mxu0 %v494
        %v513 = vpop.f32.mrf.mxu0
        %v514 = vadd.f32 0.0, %v513
        %515 = vdwg.mxu0
        %516 = vrot.lane.b32.xlu0 %v444, 96
        %v517 = vpop.permute.xlu0 %516
        %518 = vrot.lane.b32.xlu0 %v447, 96
        %v519 = vpop.permute.xlu0 %518
        %v520 = vsel %vm338, %v517, 0
        %v522 = vsel %vm338, %v519, 0
        %524 = vmatpush.xpose.msra.mxu0 0.0
        %525 = vmatpush.xpose.msra.mxu0 0.0
        %526 = vmatpush.xpose.msra.mxu0 0.0
        %527 = vmatpush.xpose.msra.mxu0 0.0
        %528 = vmatpush.xpose.msra.mxu0 0.0
        %529 = vmatpush.xpose.msra.mxu0 0.0
        %530 = vmatpush.xpose.msra.mxu0 0.0
        %531 = vmatpush.xpose.msra.mxu0 0.0
        %532 = vmatpush.xpose.msra.mxu0 0.0
        %533 = vmatpush.xpose.msra.mxu0 0.0
        %534 = vmatpush.xpose.msra.mxu0 0.0
        %535 = vmatpush.xpose.msra.mxu0 0.0
        %536 = vmatpush.xpose.msra.mxu0 0.0
        %537 = vmatpush.xpose.msra.mxu0 0.0
        %538 = vmatpush.xpose.msra.mxu0 0.0
        %539 = vmatpush.xpose.msra.mxu0 %v522
        %540 = vmatmul.f32.gmra.mxu0 %v520
        %v541 = vpop.f32.mrf.mxu0
        %v542 = vadd.f32 0.0, %v541
        %543 = vdwg.mxu0
        %v544 = vmul.f32 %v542, 0.17677669
        %v545 = vsel %vm452, %v544, -inf
        %v546 = vsel %vm481, %v545, -inf
        %547 = vmax.xlane.f32.xlu0 %v546
        %v548 = vpop.xlane.xlu0 %547
        %v549 = vsub.f32 %v545, %v548
        %v550 = vmul.f32 %v549, 1.442695
        %v551 = vpow.pop %v550
        %v552 = vsel %vm481, %v551, 0.0
        %553 = vadd.xlane.f32.xlu0 %v552
        %v554 = vpop.xlane.xlu0 %553
        %v555 = vrcp.pop %v554
        %v556 = vmul.f32 %v551, %v555
        %558 = vrot.lane.b32.xlu0 %v440, 96
        %v559 = vpop.permute.xlu0 %558
        %v562 = vsel %vm481, %v556, 0
        %564 = vmatpush.msra.mxu0 0.0
        %565 = vmatpush.msra.mxu0 0.0
        %566 = vmatpush.msra.mxu0 0.0
        %567 = vmatpush.msra.mxu0 0.0
        %568 = vmatpush.msra.mxu0 0.0
        %569 = vmatpush.msra.mxu0 0.0
        %570 = vmatpush.msra.mxu0 0.0
        %571 = vmatpush.msra.mxu0 0.0
        %572 = vmatpush.msra.mxu0 0.0
        %573 = vmatpush.msra.mxu0 0.0
        %574 = vmatpush.msra.mxu0 0.0
        %575 = vmatpush.msra.mxu0 0.0
        %576 = vmatpush.msra.mxu0 0.0
        %577 = vmatpush.msra.mxu0 0.0
        %578 = vmatpush.msra.mxu0 0.0
        %579 = vmatpush.msra.mxu0 %v559
        %580 = vmatmul.f32.gmra.mxu0 %v562
        %v581 = vpop.f32.mrf.mxu0
        %v582 = vadd.f32 0.0, %v581
        %583 = vdwg.mxu0
        %584 = vrot.lane.b32.xlu0 %v444, 64
        %v585 = vpop.permute.xlu0 %584
        %586 = vrot.lane.b32.xlu0 %v447, 64
        %v587 = vpop.permute.xlu0 %586
        %v588 = vsel %vm338, %v585, 0
        %v590 = vsel %vm338, %v587, 0
        %592 = vmatpush.xpose.msra.mxu0 0.0
        %593 = vmatpush.xpose.msra.mxu0 0.0
        %594 = vmatpush.xpose.msra.mxu0 0.0
        %595 = vmatpush.xpose.msra.mxu0 0.0
        %596 = vmatpush.xpose.msra.mxu0 0.0
        %597 = vmatpush.xpose.msra.mxu0 0.0
        %598 = vmatpush.xpose.msra.mxu0 0.0
        %599 = vmatpush.xpose.msra.mxu0 0.0
        %600 = vmatpush.xpose.msra.mxu0 0.0
        %601 = vmatpush.xpose.msra.mxu0 0.0
        %602 = vmatpush.xpose.msra.mxu0 0.0
        %603 = vmatpush.xpose.msra.mxu0 0.0
        %604 = vmatpush.xpose.msra.mxu0 0.0
        %605 = vmatpush.xpose.msra.mxu0 0.0
        %606 = vmatpush.xpose.msra.mxu0 0.0
        %607 = vmatpush.xpose.msra.mxu0 %v590
        %608 = vmatmul.f32.gmra.mxu0 %v588
        %v609 = vpop.f32.mrf.mxu0
        %v610 = vadd.f32 0.0, %v609
        %611 = vdwg.mxu0
        %v612 = vmul.f32 %v610, 0.17677669
        %v613 = vsel %vm452, %v612, -inf
        %v614 = vsel %vm481, %v613, -inf
        %615 = vmax.xlane.f32.xlu0 %v614
        %v616 = vpop.xlane.xlu0 %615
        %v617 = vsub.f32 %v613, %v616
        %v618 = vmul.f32 %v617, 1.442695
        %v619 = vpow.pop %v618
        %v620 = vsel %vm481, %v619, 0.0
        %621 = vadd.xlane.f32.xlu0 %v620
        %v622 = vpop.xlane.xlu0 %621
        %v623 = vrcp.pop %v622
        %v624 = vmul.f32 %v619, %v623
        %625 = vrot.lane.b32.xlu0 %v440, 64
        %v626 = vpop.permute.xlu0 %625
        %v629 = vsel %vm481, %v624, 0
        %631 = vmatpush.msra.mxu0 0.0
        %632 = vmatpush.msra.mxu0 0.0
        %633 = vmatpush.msra.mxu0 0.0
        %634 = vmatpush.msra.mxu0 0.0
        %635 = vmatpush.msra.mxu0 0.0
        %636 = vmatpush.msra.mxu0 0.0
        %637 = vmatpush.msra.mxu0 0.0
        %638 = vmatpush.msra.mxu0 0.0
        %639 = vmatpush.msra.mxu0 0.0
        %640 = vmatpush.msra.mxu0 0.0
        %641 = vmatpush.msra.mxu0 0.0
        %642 = vmatpush.msra.mxu0 0.0
        %643 = vmatpush.msra.mxu0 0.0
        %644 = vmatpush.msra.mxu0 0.0
        %645 = vmatpush.msra.mxu0 0.0
        %646 = vmatpush.msra.mxu0 %v626
        %647 = vmatmul.f32.gmra.mxu0 %v629
        %v648 = vpop.f32.mrf.mxu0
        %v649 = vadd.f32 0.0, %v648
        %650 = vdwg.mxu0
        %651 = vrot.lane.b32.xlu0 %v444, 32
        %v652 = vpop.permute.xlu0 %651
        %653 = vrot.lane.b32.xlu0 %v447, 32
        %v654 = vpop.permute.xlu0 %653
        %v655 = vsel %vm338, %v652, 0
        %v657 = vsel %vm338, %v654, 0
        %659 = vmatpush.xpose.msra.mxu0 0.0
        %660 = vmatpush.xpose.msra.mxu0 0.0
        %661 = vmatpush.xpose.msra.mxu0 0.0
        %662 = vmatpush.xpose.msra.mxu0 0.0
        %663 = vmatpush.xpose.msra.mxu0 0.0
        %664 = vmatpush.xpose.msra.mxu0 0.0
        %665 = vmatpush.xpose.msra.mxu0 0.0
        %666 = vmatpush.xpose.msra.mxu0 0.0
        %667 = vmatpush.xpose.msra.mxu0 0.0
        %668 = vmatpush.xpose.msra.mxu0 0.0
        %669 = vmatpush.xpose.msra.mxu0 0.0
        %670 = vmatpush.xpose.msra.mxu0 0.0
        %671 = vmatpush.xpose.msra.mxu0 0.0
        %672 = vmatpush.xpose.msra.mxu0 0.0
        %673 = vmatpush.xpose.msra.mxu0 0.0
        %674 = vmatpush.xpose.msra.mxu0 %v657
        %675 = vmatmul.f32.gmra.mxu0 %v655
        %v676 = vpop.f32.mrf.mxu0
        %v677 = vadd.f32 0.0, %v676
        %678 = vdwg.mxu0
        %v679 = vmul.f32 %v677, 0.17677669
        %v680 = vsel %vm452, %v679, -inf
        %v681 = vsel %vm481, %v680, -inf
        %682 = vmax.xlane.f32.xlu0 %v681
        %v683 = vpop.xlane.xlu0 %682
        %v684 = vsub.f32 %v680, %v683
        %v685 = vmul.f32 %v684, 1.442695
        %v686 = vpow.pop %v685
        %v687 = vsel %vm481, %v686, 0.0
        %688 = vadd.xlane.f32.xlu0 %v687
        %v689 = vpop.xlane.xlu0 %688
        %v690 = vrcp.pop %v689
        %v691 = vmul.f32 %v686, %v690
        %692 = vrot.lane.b32.xlu0 %v440, 32
        %v693 = vpop.permute.xlu0 %692
        %v696 = vsel %vm481, %v691, 0
        %698 = vmatpush.msra.mxu0 0.0
        %699 = vmatpush.msra.mxu0 0.0
        %700 = vmatpush.msra.mxu0 0.0
        %701 = vmatpush.msra.mxu0 0.0
        %702 = vmatpush.msra.mxu0 0.0
        %703 = vmatpush.msra.mxu0 0.0
        %704 = vmatpush.msra.mxu0 0.0
        %705 = vmatpush.msra.mxu0 0.0
        %706 = vmatpush.msra.mxu0 0.0
        %707 = vmatpush.msra.mxu0 0.0
        %708 = vmatpush.msra.mxu0 0.0
        %709 = vmatpush.msra.mxu0 0.0
        %710 = vmatpush.msra.mxu0 0.0
        %711 = vmatpush.msra.mxu0 0.0
        %712 = vmatpush.msra.mxu0 0.0
        %713 = vmatpush.msra.mxu0 %v693
        %714 = vmatmul.f32.gmra.mxu0 %v696
        %v715 = vpop.f32.mrf.mxu0
        %v716 = vadd.f32 0.0, %v715
        %717 = vdwg.mxu0
        %719 = vrot.lane.b32.xlu0 %v582, 32
        %v720 = vpop.permute.xlu0 %719
        %723 = vrot.lane.b32.xlu0 %v649, 64
        %v724 = vpop.permute.xlu0 %723
        %727 = vrot.lane.b32.xlu0 %v716, 96
        %v728 = vpop.permute.xlu0 %727
        %v730 = vsel %vm338, %v514, %v720
        %vm731 = vcmask 523264
        %v732 = vsel %vm731, %v730, %v724
        %vm733 = vcmask 785408
        %v734 = vsel %vm733, %v732, %v728
        %v736 = vperm.slane %v337, 0
        %738 = vmatpush.msra.mxu0 %v336
        %739 = vmatpush.msra.mxu0 %v335
        %740 = vmatpush.msra.mxu0 %v334
        %741 = vmatpush.msra.mxu0 %v333
        %742 = vmatpush.msra.mxu0 %v332
        %743 = vmatpush.msra.mxu0 %v331
        %744 = vmatpush.msra.mxu0 %v330
        %745 = vmatpush.msra.mxu0 %v329
        %746 = vmatpush.msra.mxu0 %v328
        %747 = vmatpush.msra.mxu0 %v327
        %748 = vmatpush.msra.mxu0 %v326
        %749 = vmatpush.msra.mxu0 %v325
        %750 = vmatpush.msra.mxu0 %v324
        %751 = vmatpush.msra.mxu0 %v323
        %752 = vmatpush.msra.mxu0 %v322
        %753 = vmatpush.msra.mxu0 %v321
        %754 = vmatmul.f32.gmra.mxu0 %v734
        %v755 = vpop.f32.mrf.mxu0
        %v756 = vadd.f32 %v736, %v755
        %757 = vdwg.mxu0
        %758 = vst.msk [vmem:[%s297] sm:$0xff] %vm338, %v756
        %s759 = sand.u32 %s163, 1
        %s760 = scalar_lea.sflag [#allocation4], %s759
        %s761 = sand.u32 %s163, 1
        %s762 = smul.addr %s761, 8
        %s763 = scalar_lea.vmem [#allocation8], %s762
        // Predicated region
        $region57: #{tpu_custom_call.1} parent=43 // pred_check
          %p764 = pneg %p173
        $region58: #{tpu_custom_call.1} parent=43 // pred_check_branch
          %766 = sbr.rel (%p764) target = $region60
        $region59: #{tpu_custom_call.1} parent=43 // pred_region
          %768 = vsyncadd %s760, 0
          %s769 = smul.addr %s24, 8
          %s770 = scalar_lea.hbm %s6, %s769
          %s772 = sshll.u32 %s763, 4
          %s773 = int_to_ptr.vmem [resolvable:$true] %s772
          %s774 = sshll.u32 %s770, 4
          %s775 = int_to_ptr.hbm [resolvable:$true] %s774
          %777 = dma.vmem_to_hbm [thread:$0]  %s773, 128, %s775, %s760
        $region60: #{tpu_custom_call.1} parent=43 // pred_fallthru
          _
      $region44: #{tpu_custom_call.1} parent=5 // pred_fallthru
        _
      %p778 = scmp.le.s32.totalorder 2, %s19
      // Predicated region
      $region61: #{tpu_custom_call.1} parent=5 // pred_check
        %p779 = pneg %p778
      $region62: #{tpu_custom_call.1} parent=5 // pred_check_branch
        %781 = sbr.rel (%p779) target = $region64
      $region63: #{tpu_custom_call.1} parent=5 // pred_region
        %s782 = ssub.s32 %s19, 2
        // Predicated region
        $region65: #{tpu_custom_call.1} parent=63 // pred_check
          %p783 = pneg %p179
        $region66: #{tpu_custom_call.1} parent=63 // pred_check_branch
          %785 = sbr.rel (%p783) target = $region68
        $region67: #{tpu_custom_call.1} parent=63 // pred_region
          %s786 = sand.u32 %s164, 1
          %s787 = scalar_lea.sflag [#allocation4], %s786
          %s788 = sand.u32 %s164, 1
          %s789 = smul.addr %s788, 8
          %s790 = scalar_lea.vmem [#allocation8], %s789
          %792 = dma.done %s787, 128
        $region68: #{tpu_custom_call.1} parent=63 // pred_fallthru
          _
      $region64: #{tpu_custom_call.1} parent=5 // pred_fallthru
        _
    $region6: #{tpu_custom_call.1} parent=1 // loop_footer
      %s23 = sadd.s32 1, %s19
    $region7: #{tpu_custom_call.1} parent=1 // loop_footer_branch
      %18 = sbr.rel target = $region3
    $region8: #{tpu_custom_call.1} parent=1 // loop_exit
      _
    %793 = vsyncpa [#allocation3], 1
    %s794 = scalar_lea.sflag [#allocation3], 1
    %795 = vsyncpa %s794, 1
    %796 = vsyncpa [#allocation6], 1
    %797 = vsyncpa [#allocation4], 1
    %s798 = scalar_lea.sflag [#allocation4], 1
    %799 = vsyncpa %s798, 1

</llo_original>
